<compile_context>
chip_gen: v5e
topology: v5e:2x2
jax: 0.10.0
libtpu: 0.0.40
codegen_flags: <defaults>
</compile_context>

<pallas_src>
import functools
import numpy as np
import jax
import jax.numpy as jnp
from jax.experimental import pallas as pl
from jax.experimental.pallas import tpu as pltpu


# ------------------------------- helpers --------------------------------------
def _round_up(x, m):
    return ((x + m - 1) // m) * m


def _shift_lanes(x, off):
    """shifted[:, q] = x[:, q + off] (with wrap-around).

    Wrapped-around columns only ever land on non-interior (masked / discarded) pixels, so the
    wrap semantics are harmless.  jnp.roll with a static shift lowers to two lane slices + a
    concat, which keeps the semantics unambiguous.
    """
    if off == 0:
        return x
    return jnp.roll(x, -off, axis=1)


# ----------------------------- Pallas kernel ----------------------------------
def fused_cnn_kernel(slab_ref, w1_ref, b1_ref, w2_ref, b2_ref, w3_ref, b3_ref, mask_ref,
                     o_ref, *, tap_offsets, compute_dtype):
    """Fused DummyCNN forward for one image, pixels on the lane axis.

    slab_ref : (27, Ppad)   conv1 im2col of the padded input, channel-major (tap-major rows)
    w1_ref   : (16, 27)     folded conv1 weights          b1_ref : (16, 1)
    w2_ref   : (32, 144)    folded conv2 weights          b2_ref : (32, 1)
    w3_ref   : (32, 1)      1x1 conv weights (Cout = 1)   b3_ref : (1, 1)
    mask_ref : (1, Ppad)    1.0 at interior pixels of the zero-padded image, else 0.0
    o_ref    : (1, Ppad)    lane-dense output row (interior pixels extracted by the wrapper)
    """
    # Conv1 (3x3, taps pre-folded by the wrapper) + bias + ReLU, then zero the padded border
    # so it acts as the zero padding of conv2's input.
    h1 = jnp.dot(w1_ref[...], slab_ref[...], preferred_element_type=jnp.float32)
    h1 = jnp.maximum(h1 + b1_ref[...], 0.0) * mask_ref[...]
    h1 = h1.astype(compute_dtype)                                   # (16, Ppad)

    # Conv2 (3x3): fold the 9 taps in-kernel via lane shifts of the resident h1, then one
    # (32, 144) @ (144, Ppad) MXU matmul.  Sublane concat offsets are multiples of 16.
    r = jnp.concatenate([_shift_lanes(h1, off) for off in tap_offsets], axis=0)  # (144, Ppad)
    h2 = jnp.dot(w2_ref[...], r, preferred_element_type=jnp.float32)
    h2 = jnp.maximum(h2 + b2_ref[...], 0.0)                          # (32, Ppad) f32

    # Conv3 (1x1, Cout=1): channel reduction -> lane-dense (1, Ppad) row, unmasked stores.
    y = jnp.sum(h2 * w3_ref[...], axis=0, keepdims=True) + b3_ref[...]
    o_ref[...] = y.astype(o_ref.dtype)


# ------------------------------ glue (JAX) ------------------------------------
def _forward(x_nchw, params, compute_dtype):
    """DummyCNN forward. x_nchw: (B, 3, H, W) -> (B, 1, H, W)."""
    cd = jnp.dtype(compute_dtype)
    w1, b1, w2, b2, w3, b3 = params                     # HWIO weights (PyTorch OIHW transposed)
    B, Cin, H, W = x_nchw.shape
    C1, C2 = w1.shape[-1], w2.shape[-1]
    Hp, Wp = H + 2, W + 2
    P = Hp * Wp
    Ppad = _round_up(P, 128)                            # lane-dense pixel axis
    K1, K2 = 9 * Cin, 9 * C1

    # 3x3 tap offsets in flattened padded-pixel coordinates (row-major over (dy, dx)).
    offs = [(dy - 1) * Wp + (dx - 1) for dy in range(3) for dx in range(3)]

    # Channel-major, spatially zero-padded, flattened pixel axis.  Cast to compute dtype FIRST
    # so every XLA-materialized intermediate is half-size on the bf16 path.
    xp = jnp.pad(x_nchw.astype(cd), ((0, 0), (0, 0), (1, 1), (1, 1)))   # (B, Cin, Hp, Wp)
    xflat = xp.reshape(B, Cin, P)
    # Conv1 im2col on the tiny 3-channel raw input (wrap-around only hits masked pixels).
    slab = jnp.concatenate(
        [xflat if o == 0 else jnp.roll(xflat, -o, axis=2) for o in offs], axis=1)  # (B, 27, P)
    slab = jnp.pad(slab, ((0, 0), (0, 0), (0, Ppad - P)))                          # (B, 27, Ppad)

    # Folded weights, (Cout, K) channel-major layout matching the slab / concat row ordering.
    w1m = jnp.transpose(w1.reshape(9, Cin, C1), (2, 0, 1)).reshape(C1, K1).astype(cd)
    w2m = jnp.transpose(w2.reshape(9, C1, C2), (2, 0, 1)).reshape(C2, K2).astype(cd)
    b1m = b1.reshape(C1, 1).astype(jnp.float32)
    b2m = b2.reshape(C2, 1).astype(jnp.float32)
    w3m = w3.reshape(C2, 1).astype(jnp.float32)
    b3m = b3.reshape(1, 1).astype(jnp.float32)

    # Interior-pixel mask: 1.0 at real pixels, 0.0 at SAME-pad border and lane-pad tail.
    mask = jnp.zeros((Hp, Wp), jnp.float32).at[1:H + 1, 1:W + 1].set(1.0).reshape(1, P)
    mask = jnp.pad(mask, ((0, 0), (0, Ppad - P)))

    cost = pl.CostEstimate(
        flops=2 * B * Ppad * (K1 * C1 + K2 * C2 + C2),
        transcendentals=0,
        bytes_accessed=(slab.size * slab.dtype.itemsize
                        + w1m.size * w1m.dtype.itemsize + w2m.size * w2m.dtype.itemsize
                        + (C1 + C2 + C2 + 1 + Ppad) * 4
                        + B * Ppad * 4))

    out = pl.pallas_call(
        functools.partial(fused_cnn_kernel, tap_offsets=tuple(offs), compute_dtype=cd),
        out_shape=jax.ShapeDtypeStruct((B, 1, Ppad), jnp.float32),
        grid=(B,),
        in_specs=[
            pl.BlockSpec((None, K1, Ppad), lambda b: (b, 0, 0)),   # per-image conv1 slab
            pl.BlockSpec((C1, K1), lambda b: (0, 0)),              # resident weights / biases
            pl.BlockSpec((C1, 1), lambda b: (0, 0)),
            pl.BlockSpec((C2, K2), lambda b: (0, 0)),
            pl.BlockSpec((C2, 1), lambda b: (0, 0)),
            pl.BlockSpec((C2, 1), lambda b: (0, 0)),
            pl.BlockSpec((1, 1), lambda b: (0, 0)),
            pl.BlockSpec((1, Ppad), lambda b: (0, 0)),             # resident interior mask
        ],
        out_specs=pl.BlockSpec((None, 1, Ppad), lambda b: (b, 0, 0)),
        compiler_params=pltpu.CompilerParams(dimension_semantics=("parallel",)),
        cost_estimate=cost,
    )(slab, w1m, b1m, w2m, b2m, w3m, b3m, mask)

    # Extract interior pixels: (B, 1, Ppad) -> (B, 1, H, W).
    y = out[:, 0, :P].reshape(B, Hp, Wp)[:, 1:H + 1, 1:W + 1]
    return y[:, None, :, :]


dummy_cnn_forward = jax.jit(_forward, static_argnames=("compute_dtype",))


# ------------------------- pure-JAX reference --------------------------------
def ref_forward(x_nchw, params):
    w1, b1, w2, b2, w3, b3 = params
    x = jnp.transpose(x_nchw, (0, 2, 3, 1)).astype(jnp.float32)

    def conv(x, w, b, relu):
        y = jax.lax.conv_general_dilated(
            x, w, window_strides=(1, 1), padding="SAME",
            dimension_numbers=("NHWC", "HWIO", "NHWC")) + b.reshape(1, 1, 1, -1)
        return jnp.maximum(y, 0.0) if relu else y

    h = conv(x, w1, b1, True)
    h = conv(h, w2, b2, True)
    y = conv(h, w3, b3, False)
    return jnp.transpose(y, (0, 3, 1, 2))


# --------------------------------- main ---------------------------------------
if __name__ == "__main__":
    key = jax.random.PRNGKey(0)
    ks = jax.random.split(key, 7)

    B, Cin, H, W = 2, 3, 16, 16
    x = jax.random.normal(ks[0], (B, Cin, H, W), jnp.float32)

    # Deterministic synthetic parameters (HWIO layout == PyTorch OIHW transposed).
    w1 = jax.random.normal(ks[1], (3, 3, 3, 16), jnp.float32) * 0.10
    b1 = jax.random.normal(ks[2], (16,), jnp.float32) * 0.10
    w2 = jax.random.normal(ks[3], (3, 3, 16, 32), jnp.float32) * 0.05
    b2 = jax.random.normal(ks[4], (32,), jnp.float32) * 0.05
    w3 = jax.random.normal(ks[5], (1, 1, 32, 1), jnp.float32) * 0.10
    b3 = jax.random.normal(ks[6], (1,), jnp.float32) * 0.10
    params = (w1, b1, w2, b2, w3, b3)

    ref = jax.block_until_ready(ref_forward(x, params))

    # f32 compute path: tight check against the XLA conv reference.
    out_f32 = jax.block_until_ready(
        dummy_cnn_forward(x, params, compute_dtype="float32"))
    assert out_f32.shape == (B, 1, H, W), out_f32.shape
    np.testing.assert_allclose(np.asarray(out_f32), np.asarray(ref),
                               rtol=1e-4, atol=1e-4)

    # bf16 MXU-input path (perf default on v5e/v6e/v7x): f32 accumulation, looser tolerance.
    out_bf16 = jax.block_until_ready(
        dummy_cnn_forward(x, params, compute_dtype="bfloat16"))
    assert out_bf16.shape == (B, 1, H, W), out_bf16.shape
    np.testing.assert_allclose(np.asarray(out_bf16), np.asarray(ref),
                               rtol=3e-2, atol=3e-2)

    print("KERNEL_OK")
</pallas_src>

<mosaic_0001>
module attributes {stable_mosaic.version = 11 : i64} {
  func.func @fused_cnn_kernel(%arg0: i32, %arg1: memref<1x27x384xf32, #tpu.memory_space<vmem>>, %arg2: memref<16x27xf32, #tpu.memory_space<vmem>>, %arg3: memref<16x1xf32, #tpu.memory_space<vmem>>, %arg4: memref<32x144xf32, #tpu.memory_space<vmem>>, %arg5: memref<32x1xf32, #tpu.memory_space<vmem>>, %arg6: memref<32x1xf32, #tpu.memory_space<vmem>>, %arg7: memref<1x1xf32, #tpu.memory_space<vmem>>, %arg8: memref<1x384xf32, #tpu.memory_space<vmem>>, %arg9: memref<1x1x384xf32, #tpu.memory_space<vmem>>) attributes {dimension_semantics = [#tpu.dimension_semantics<parallel>], iteration_bounds = array<i64: 2>, scalar_prefetch = 0 : i64, scratch_operands = 0 : i64, tpu.core_type = #tpu.core_type<tc>, window_params = [{transform_indices = @transform_0, window_bounds = array<i64: 1, 27, 384>}, {pipeline_mode = #tpu.pipeline_mode<synchronous>, transform_indices = @transform_1, window_bounds = array<i64: 16, 27>}, {pipeline_mode = #tpu.pipeline_mode<synchronous>, transform_indices = @transform_2, window_bounds = array<i64: 16, 1>}, {pipeline_mode = #tpu.pipeline_mode<synchronous>, transform_indices = @transform_3, window_bounds = array<i64: 32, 144>}, {pipeline_mode = #tpu.pipeline_mode<synchronous>, transform_indices = @transform_4, window_bounds = array<i64: 32, 1>}, {pipeline_mode = #tpu.pipeline_mode<synchronous>, transform_indices = @transform_5, window_bounds = array<i64: 32, 1>}, {pipeline_mode = #tpu.pipeline_mode<synchronous>, transform_indices = @transform_6, window_bounds = array<i64: 1, 1>}, {pipeline_mode = #tpu.pipeline_mode<synchronous>, transform_indices = @transform_7, window_bounds = array<i64: 1, 384>}, {transform_indices = @transform_8, window_bounds = array<i64: 1, 1, 384>}]} {
    %c0 = arith.constant 0 : index
    %c0_0 = arith.constant 0 : index
    %0 = vector.load %arg2[%c0, %c0_0] : memref<16x27xf32, #tpu.memory_space<vmem>>, vector<16x27xf32>
    %c0_1 = arith.constant 0 : index
    %c0_2 = arith.constant 0 : index
    %c0_3 = arith.constant 0 : index
    %1 = vector.load %arg1[%c0_1, %c0_2, %c0_3] : memref<1x27x384xf32, #tpu.memory_space<vmem>>, vector<1x27x384xf32>
    %2 = vector.shape_cast %1 : vector<1x27x384xf32> to vector<27x384xf32>
    %cst = arith.constant dense<0.000000e+00> : vector<16x384xf32>
    %3 = tpu.matmul %0, %2, %cst {dimension_numbers = #tpu.dot_dimension_numbers<[1], [0], [0], [1], [0, 0, 1, 1], [], []>} : vector<16x27xf32>, vector<27x384xf32>, vector<16x384xf32> -> vector<16x384xf32>
    %c0_4 = arith.constant 0 : index
    %c0_5 = arith.constant 0 : index
    %4 = vector.load %arg3[%c0_4, %c0_5] : memref<16x1xf32, #tpu.memory_space<vmem>>, vector<16x1xf32>
    %5 = vector.broadcast %4 : vector<16x1xf32> to vector<16x384xf32>
    %6 = arith.addf %3, %5 : vector<16x384xf32>
    %cst_6 = arith.constant 0.000000e+00 : f32
    %7 = vector.broadcast %cst_6 : f32 to vector<16x384xf32>
    %8 = arith.maximumf %6, %7 : vector<16x384xf32>
    %c0_7 = arith.constant 0 : index
    %c0_8 = arith.constant 0 : index
    %9 = vector.load %arg8[%c0_7, %c0_8] : memref<1x384xf32, #tpu.memory_space<vmem>>, vector<1x384xf32>
    %10 = vector.broadcast %9 : vector<1x384xf32> to vector<16x384xf32>
    %11 = arith.mulf %8, %10 : vector<16x384xf32>
    %12 = vector.extract_strided_slice %11 {offsets = [0, 365], sizes = [16, 19], strides = [1, 1]} : vector<16x384xf32> to vector<16x19xf32>
    %13 = vector.extract_strided_slice %11 {offsets = [0, 0], sizes = [16, 365], strides = [1, 1]} : vector<16x384xf32> to vector<16x365xf32>
    %14 = tpu.concatenate %12, %13 in 1 : vector<16x19xf32>, vector<16x365xf32> -> vector<16x384xf32>
    %15 = vector.extract_strided_slice %11 {offsets = [0, 366], sizes = [16, 18], strides = [1, 1]} : vector<16x384xf32> to vector<16x18xf32>
    %16 = vector.extract_strided_slice %11 {offsets = [0, 0], sizes = [16, 366], strides = [1, 1]} : vector<16x384xf32> to vector<16x366xf32>
    %17 = tpu.concatenate %15, %16 in 1 : vector<16x18xf32>, vector<16x366xf32> -> vector<16x384xf32>
    %18 = vector.extract_strided_slice %11 {offsets = [0, 367], sizes = [16, 17], strides = [1, 1]} : vector<16x384xf32> to vector<16x17xf32>
    %19 = vector.extract_strided_slice %11 {offsets = [0, 0], sizes = [16, 367], strides = [1, 1]} : vector<16x384xf32> to vector<16x367xf32>
    %20 = tpu.concatenate %18, %19 in 1 : vector<16x17xf32>, vector<16x367xf32> -> vector<16x384xf32>
    %21 = vector.extract_strided_slice %11 {offsets = [0, 383], sizes = [16, 1], strides = [1, 1]} : vector<16x384xf32> to vector<16x1xf32>
    %22 = vector.extract_strided_slice %11 {offsets = [0, 0], sizes = [16, 383], strides = [1, 1]} : vector<16x384xf32> to vector<16x383xf32>
    %23 = tpu.concatenate %21, %22 in 1 : vector<16x1xf32>, vector<16x383xf32> -> vector<16x384xf32>
    %24 = vector.extract_strided_slice %11 {offsets = [0, 1], sizes = [16, 383], strides = [1, 1]} : vector<16x384xf32> to vector<16x383xf32>
    %25 = vector.extract_strided_slice %11 {offsets = [0, 0], sizes = [16, 1], strides = [1, 1]} : vector<16x384xf32> to vector<16x1xf32>
    %26 = tpu.concatenate %24, %25 in 1 : vector<16x383xf32>, vector<16x1xf32> -> vector<16x384xf32>
    %27 = vector.extract_strided_slice %11 {offsets = [0, 17], sizes = [16, 367], strides = [1, 1]} : vector<16x384xf32> to vector<16x367xf32>
    %28 = vector.extract_strided_slice %11 {offsets = [0, 0], sizes = [16, 17], strides = [1, 1]} : vector<16x384xf32> to vector<16x17xf32>
    %29 = tpu.concatenate %27, %28 in 1 : vector<16x367xf32>, vector<16x17xf32> -> vector<16x384xf32>
    %30 = vector.extract_strided_slice %11 {offsets = [0, 18], sizes = [16, 366], strides = [1, 1]} : vector<16x384xf32> to vector<16x366xf32>
    %31 = vector.extract_strided_slice %11 {offsets = [0, 0], sizes = [16, 18], strides = [1, 1]} : vector<16x384xf32> to vector<16x18xf32>
    %32 = tpu.concatenate %30, %31 in 1 : vector<16x366xf32>, vector<16x18xf32> -> vector<16x384xf32>
    %33 = vector.extract_strided_slice %11 {offsets = [0, 19], sizes = [16, 365], strides = [1, 1]} : vector<16x384xf32> to vector<16x365xf32>
    %34 = vector.extract_strided_slice %11 {offsets = [0, 0], sizes = [16, 19], strides = [1, 1]} : vector<16x384xf32> to vector<16x19xf32>
    %35 = tpu.concatenate %33, %34 in 1 : vector<16x365xf32>, vector<16x19xf32> -> vector<16x384xf32>
    %36 = tpu.concatenate %14, %17, %20, %23, %11, %26, %29, %32, %35 in 0 : vector<16x384xf32>, vector<16x384xf32>, vector<16x384xf32>, vector<16x384xf32>, vector<16x384xf32>, vector<16x384xf32>, vector<16x384xf32>, vector<16x384xf32>, vector<16x384xf32> -> vector<144x384xf32>
    %c0_9 = arith.constant 0 : index
    %c0_10 = arith.constant 0 : index
    %37 = vector.load %arg4[%c0_9, %c0_10] : memref<32x144xf32, #tpu.memory_space<vmem>>, vector<32x144xf32>
    %cst_11 = arith.constant dense<0.000000e+00> : vector<32x384xf32>
    %38 = tpu.matmul %37, %36, %cst_11 {dimension_numbers = #tpu.dot_dimension_numbers<[1], [0], [0], [1], [0, 0, 1, 1], [], []>} : vector<32x144xf32>, vector<144x384xf32>, vector<32x384xf32> -> vector<32x384xf32>
    %c0_12 = arith.constant 0 : index
    %c0_13 = arith.constant 0 : index
    %39 = vector.load %arg5[%c0_12, %c0_13] : memref<32x1xf32, #tpu.memory_space<vmem>>, vector<32x1xf32>
    %40 = vector.broadcast %39 : vector<32x1xf32> to vector<32x384xf32>
    %41 = arith.addf %38, %40 : vector<32x384xf32>
    %cst_14 = arith.constant 0.000000e+00 : f32
    %42 = vector.broadcast %cst_14 : f32 to vector<32x384xf32>
    %43 = arith.maximumf %41, %42 : vector<32x384xf32>
    %c0_15 = arith.constant 0 : index
    %c0_16 = arith.constant 0 : index
    %44 = vector.load %arg6[%c0_15, %c0_16] : memref<32x1xf32, #tpu.memory_space<vmem>>, vector<32x1xf32>
    %45 = vector.broadcast %44 : vector<32x1xf32> to vector<32x384xf32>
    %46 = arith.mulf %43, %45 : vector<32x384xf32>
    %cst_17 = arith.constant dense<0.000000e+00> : vector<384xf32>
    %47 = vector.multi_reduction <add>, %46, %cst_17 [0] : vector<32x384xf32> to vector<384xf32>
    %48 = vector.shape_cast %47 : vector<384xf32> to vector<1x384xf32>
    %c0_18 = arith.constant 0 : index
    %c0_19 = arith.constant 0 : index
    %49 = vector.load %arg7[%c0_18, %c0_19] : memref<1x1xf32, #tpu.memory_space<vmem>>, vector<1x1xf32>
    %50 = vector.broadcast %49 : vector<1x1xf32> to vector<1x384xf32>
    %51 = arith.addf %48, %50 : vector<1x384xf32>
    %c0_20 = arith.constant 0 : index
    %c0_21 = arith.constant 0 : index
    %c0_22 = arith.constant 0 : index
    %52 = vector.load %arg9[%c0_20, %c0_21, %c0_22] : memref<1x1x384xf32, #tpu.memory_space<vmem>>, vector<1x1x384xf32>
    %53 = vector.shape_cast %52 : vector<1x1x384xf32> to vector<1x384xf32>
    %54 = vector.shape_cast %51 : vector<1x384xf32> to vector<1x1x384xf32>
    tpu.vector_store %arg9[%c0_20, %c0_21, %c0_22], %54 {strides = array<i32>} : memref<1x1x384xf32, #tpu.memory_space<vmem>>, vector<1x1x384xf32>,
    return
  }
  func.func @transform_0(%arg0: i32) -> (i32, i32, i32) {
    %c0_i32 = arith.constant 0 : i32
    %c0_i32_0 = arith.constant 0 : i32
    %c0_i32_1 = arith.constant 0 : i32
    return %arg0, %c0_i32, %c0_i32_0 : i32, i32, i32
  }
  func.func @transform_1(%arg0: i32) -> (i32, i32) {
    %c0_i32 = arith.constant 0 : i32
    %c0_i32_0 = arith.constant 0 : i32
    %c0_i32_1 = arith.constant 0 : i32
    return %c0_i32, %c0_i32_0 : i32, i32
  }
  func.func @transform_2(%arg0: i32) -> (i32, i32) {
    %c0_i32 = arith.constant 0 : i32
    %c0_i32_0 = arith.constant 0 : i32
    %c0_i32_1 = arith.constant 0 : i32
    return %c0_i32, %c0_i32_0 : i32, i32
  }
  func.func @transform_3(%arg0: i32) -> (i32, i32) {
    %c0_i32 = arith.constant 0 : i32
    %c0_i32_0 = arith.constant 0 : i32
    %c0_i32_1 = arith.constant 0 : i32
    return %c0_i32, %c0_i32_0 : i32, i32
  }
  func.func @transform_4(%arg0: i32) -> (i32, i32) {
    %c0_i32 = arith.constant 0 : i32
    %c0_i32_0 = arith.constant 0 : i32
    %c0_i32_1 = arith.constant 0 : i32
    return %c0_i32, %c0_i32_0 : i32, i32
  }
  func.func @transform_5(%arg0: i32) -> (i32, i32) {
    %c0_i32 = arith.constant 0 : i32
    %c0_i32_0 = arith.constant 0 : i32
    %c0_i32_1 = arith.constant 0 : i32
    return %c0_i32, %c0_i32_0 : i32, i32
  }
  func.func @transform_6(%arg0: i32) -> (i32, i32) {
    %c0_i32 = arith.constant 0 : i32
    %c0_i32_0 = arith.constant 0 : i32
    %c0_i32_1 = arith.constant 0 : i32
    return %c0_i32, %c0_i32_0 : i32, i32
  }
  func.func @transform_7(%arg0: i32) -> (i32, i32) {
    %c0_i32 = arith.constant 0 : i32
    %c0_i32_0 = arith.constant 0 : i32
    %c0_i32_1 = arith.constant 0 : i32
    return %c0_i32, %c0_i32_0 : i32, i32
  }
  func.func @transform_8(%arg0: i32) -> (i32, i32, i32) {
    %c0_i32 = arith.constant 0 : i32
    %c0_i32_0 = arith.constant 0 : i32
    %c0_i32_1 = arith.constant 0 : i32
    return %arg0, %c0_i32, %c0_i32_0 : i32, i32, i32
  }
}

</mosaic_0001>

<llo_original>
// kernel: squeeze.1
$region0: #{squeeze.1}
  %s0 = inlined_call_operand.vmem [shape: f32[2,324], index: 0, kind: input, shape index: {}]
  %s1 = inlined_call_operand.vmem [shape: f32[2,18,18], index: 1, kind: output, shape index: {}]
  $region1: #{squeeze.1} parent=0
    #allocation0 [shape = 'u8[12288]{0}', space=vmem, size = 0x3000, scoped, tag = 'scoped mem for input reshape']
    %s3 = ssub.s32 4, 1
    %s4 = scalar_lea.vmem %s0, 4
    %v5 = vld [vmem:[%s4] sm:%s3]
    %s6 = scalar_lea.vmem [#allocation0], 16
    %7 = vst [vmem:[%s6] sm:%s3] %v5
    %s8 = scalar_lea.vmem %s0, 2
    %v9 = vld [vmem:[%s8] sm:%s3]
    %s10 = scalar_lea.vmem [#allocation0], 8
    %11 = vst [vmem:[%s10] sm:%s3] %v9
    %v12 = vld [vmem:[%s0] sm:%s3]
    %13 = vst [vmem:[#allocation0] sm:%s3] %v12
    %v14 = vld [vmem:[#allocation0] sm:$0x3]
    %vm15 = vcmask 146432
    %16 = vst.msk [vmem:[%s1] ss:$24 sm:$0x3] %vm15, %v14
    %s17 = scalar_lea.vmem [#allocation0], 17
    %s18 = smov 3
    %v19 = vld [vmem:[%s17] ss:$-1 sm:%s18]
    %20 = vrot.lane.b32.xlu0 %v19, 114
    %v21 = vpop.permute.xlu0 %20
    %vm22 = vcmask 146432
    %s23 = scalar_lea.vmem %s1, 39
    %24 = vst.msk [vmem:[%s23] ss:$-24 sm:$0x3] %vm22, %v21
    %s25 = scalar_lea.vmem [#allocation0], 9
    %s26 = smov 3
    %v27 = vld [vmem:[%s25] ss:$-1 sm:%s26]
    %28 = vrot.lane.b32.xlu0 %v27, 112
    %v29 = vpop.permute.xlu0 %28
    %vm30 = vcmask 146432
    %s31 = scalar_lea.vmem %s1, 32
    %32 = vst.msk [vmem:[%s31] ss:$-24 sm:$0x3] %vm30, %v29
    %v33 = vld [vmem:[#allocation0] sm:$0x3]
    %34 = vrot.lane.b32.xlu0 %v33, 110
    %v35 = vpop.permute.xlu0 %34
    %vm36 = vcmask 146432
    %s37 = scalar_lea.vmem %s1, 1
    %38 = vst.msk [vmem:[%s37] ss:$24 sm:$0x3] %vm36, %v35
    %s39 = scalar_lea.vmem [#allocation0], 17
    %s40 = smov 3
    %v41 = vld [vmem:[%s39] ss:$-1 sm:%s40]
    %42 = vrot.lane.b32.xlu0 %v41, 96
    %v43 = vpop.permute.xlu0 %42
    %vm44 = vcmask 146432
    %s45 = scalar_lea.vmem %s1, 40
    %46 = vst.msk [vmem:[%s45] ss:$-24 sm:$0x3] %vm44, %v43
    %s47 = scalar_lea.vmem [#allocation0], 9
    %s48 = smov 3
    %v49 = vld [vmem:[%s47] ss:$-1 sm:%s48]
    %50 = vrot.lane.b32.xlu0 %v49, 94
    %v51 = vpop.permute.xlu0 %50
    %vm52 = vcmask 146432
    %s53 = scalar_lea.vmem %s1, 33
    %54 = vst.msk [vmem:[%s53] ss:$-24 sm:$0x3] %vm52, %v51
    %v55 = vld [vmem:[#allocation0] sm:$0x3]
    %56 = vrot.lane.b32.xlu0 %v55, 92
    %v57 = vpop.permute.xlu0 %56
    %vm58 = vcmask 146432
    %s59 = scalar_lea.vmem %s1, 2
    %60 = vst.msk [vmem:[%s59] ss:$24 sm:$0x3] %vm58, %v57
    %s61 = scalar_lea.vmem [#allocation0], 17
    %s62 = smov 3
    %v63 = vld [vmem:[%s61] ss:$-1 sm:%s62]
    %64 = vrot.lane.b32.xlu0 %v63, 78
    %v65 = vpop.permute.xlu0 %64
    %vm66 = vcmask 146432
    %s67 = scalar_lea.vmem %s1, 41
    %68 = vst.msk [vmem:[%s67] ss:$-24 sm:$0x3] %vm66, %v65
    %s69 = scalar_lea.vmem [#allocation0], 9
    %s70 = smov 3
    %v71 = vld [vmem:[%s69] ss:$-1 sm:%s70]
    %72 = vrot.lane.b32.xlu0 %v71, 76
    %v73 = vpop.permute.xlu0 %72
    %vm74 = vcmask 146432
    %s75 = scalar_lea.vmem %s1, 34
    %76 = vst.msk [vmem:[%s75] ss:$-24 sm:$0x3] %vm74, %v73
    %v77 = vld [vmem:[#allocation0] sm:$0x3]
    %78 = vrot.lane.b32.xlu0 %v77, 74
    %v79 = vpop.permute.xlu0 %78
    %vm80 = vcmask 146432
    %s81 = scalar_lea.vmem %s1, 3
    %82 = vst.msk [vmem:[%s81] ss:$24 sm:$0x3] %vm80, %v79
    %s83 = scalar_lea.vmem [#allocation0], 9
    %s84 = smov 3
    %v85 = vld [vmem:[%s83] ss:$-1 sm:%s84]
    %86 = vrot.lane.b32.xlu0 %v85, 58
    %v87 = vpop.permute.xlu0 %86
    %vm88 = vcmask 146432
    %s89 = scalar_lea.vmem %s1, 35
    %90 = vst.msk [vmem:[%s89] ss:$-24 sm:$0x3] %vm88, %v87
    %v91 = vld [vmem:[#allocation0] sm:$0x3]
    %92 = vrot.lane.b32.xlu0 %v91, 56
    %v93 = vpop.permute.xlu0 %92
    %vm94 = vcmask 146432
    %s95 = scalar_lea.vmem %s1, 4
    %96 = vst.msk [vmem:[%s95] ss:$24 sm:$0x3] %vm94, %v93
    %s97 = scalar_lea.vmem [#allocation0], 9
    %s98 = smov 3
    %v99 = vld [vmem:[%s97] ss:$-1 sm:%s98]
    %100 = vrot.lane.b32.xlu0 %v99, 40
    %v101 = vpop.permute.xlu0 %100
    %vm102 = vcmask 146432
    %s103 = scalar_lea.vmem %s1, 36
    %104 = vst.msk [vmem:[%s103] ss:$-24 sm:$0x3] %vm102, %v101
    %v105 = vld [vmem:[#allocation0] sm:$0x3]
    %106 = vrot.lane.b32.xlu0 %v105, 38
    %v107 = vpop.permute.xlu0 %106
    %vm108 = vcmask 146432
    %s109 = scalar_lea.vmem %s1, 5
    %110 = vst.msk [vmem:[%s109] ss:$24 sm:$0x3] %vm108, %v107
    %s111 = scalar_lea.vmem [#allocation0], 9
    %s112 = smov 3
    %v113 = vld [vmem:[%s111] ss:$-1 sm:%s112]
    %114 = vrot.lane.b32.xlu0 %v113, 22
    %v115 = vpop.permute.xlu0 %114
    %vm116 = vcmask 146432
    %s117 = scalar_lea.vmem %s1, 37
    %118 = vst.msk [vmem:[%s117] ss:$-24 sm:$0x3] %vm116, %v115
    %v119 = vld [vmem:[#allocation0] sm:$0x3]
    %120 = vrot.lane.b32.xlu0 %v119, 20
    %v121 = vpop.permute.xlu0 %120
    %vm122 = vcmask 146432
    %s123 = scalar_lea.vmem %s1, 6
    %124 = vst.msk [vmem:[%s123] ss:$24 sm:$0x3] %vm122, %v121
    %s125 = scalar_lea.vmem [#allocation0], 9
    %s126 = smov 3
    %v127 = vld [vmem:[%s125] ss:$-1 sm:%s126]
    %s128 = scalar_lea.vmem [#allocation0], 17
    %s129 = smov 3
    %v130 = vld [vmem:[%s128] ss:$-1 sm:%s129]
    %vm131 = vcmask 1014784
    %v132 = vsel %vm131, %v130, %v127
    %133 = vrot.lane.b32.xlu0 %v132, 4
    %v134 = vpop.permute.xlu0 %133
    %vm135 = vcmask 31744
    %s136 = scalar_lea.vmem %s1, 38
    %137 = vst.msk [vmem:[%s136] ss:$-24 sm:$0x3] %vm135, %v134
    %vm138 = vcmask 146464
    %s139 = scalar_lea.vmem %s1, 38
    %140 = vst.msk [vmem:[%s139] ss:$-24 sm:$0x3] %vm138, %v134
    %v141 = vld [vmem:[#allocation0] sm:$0x3]
    %s142 = scalar_lea.vmem [#allocation0], 8
    %v143 = vld [vmem:[%s142] sm:$0x3]
    %vm144 = vcmask 1031168
    %v145 = vsel %vm144, %v143, %v141
    %146 = vrot.lane.b32.xlu0 %v145, 2
    %v147 = vpop.permute.xlu0 %146
    %vm148 = vcmask 15360
    %s149 = scalar_lea.vmem %s1, 7
    %150 = vst.msk [vmem:[%s149] ss:$24 sm:$0x3] %vm148, %v147
    %vm151 = vcmask 146448
    %s152 = scalar_lea.vmem %s1, 7
    %153 = vst.msk [vmem:[%s152] ss:$24 sm:$0x3] %vm151, %v147

// kernel: _forward.1
$region0: #{_forward.1}
  #allocation0 [shape = 'u32[]', space=smem, size = 0x4, offset = 0x4, fixed_abs, tag = 'smem constant byte address 0x4 - core index']
  #allocation1 [shape = 'u32[72,128]{1,0:T(1,128)}', space=vmem, size = 0x9000, scoped, tag = 'internal scratch']
  #allocation2 [shape = 'f32[1,1]{1,0:T(1,128)S(1)}', space=vmem, size = 0x200, scoped, tag = 'scoped memory for _forward.1']
  %s0 = inlined_call_operand.vmem [shape: f32[2,27,384], index: 0, kind: input, shape index: {}]
  %s1 = inlined_call_operand.vmem [shape: f32[16,27], index: 1, kind: input, shape index: {}]
  %s2 = inlined_call_operand.vmem [shape: f32[16,1], index: 2, kind: input, shape index: {}]
  %s3 = inlined_call_operand.vmem [shape: f32[32,144], index: 3, kind: input, shape index: {}]
  %s4 = inlined_call_operand.vmem [shape: f32[32,1], index: 4, kind: input, shape index: {}]
  %s5 = inlined_call_operand.vmem [shape: f32[32,1], index: 5, kind: input, shape index: {}]
  %s6 = inlined_call_operand.<no memory space> [shape: f32[1,1], index: 6, kind: input, shape index: {}]
  %s7 = inlined_call_operand.vmem [shape: f32[1,384], index: 7, kind: input, shape index: {}]
  %s8 = inlined_call_operand.vmem [shape: f32[2,1,384], index: 8, kind: output, shape index: {}]
  %s9 = sld [smem:[#allocation0]]
  $region65: #{_forward.1} parent=0
    _
  %s11 = ssub.s32 1, %s9
  %s12 = scalar_select 0, %s11, %s9
  %v13 = vstv %s6
  %14 = vst [vmem:[#allocation2] sm:$0x1] %v13
  loop: start=0, step=1, limit=4
  $region2: #{_forward.1} parent=0 // loop_pre_header
    _
  $region3: #{_forward.1} parent=0 // loop_header
    %s16 = sphi 0, %s20
    %p17 = scmp.ge.s32.totalorder %s16, 4
    %s26 = sphi 0, %s28
    %s29 = sphi 0, %s26
    %s30 = sphi 0, %s29
    %s46 = sphi 0, %s30
    %s50 = sphi 0, %s50
    %s52 = sphi 0, %s50
    %s53 = sphi 0, %s52
    %s67 = sphi 0, %s53
    %s71 = sphi 0, %s71
    %s73 = sphi 0, %s71
    %s74 = sphi 0, %s73
    %s88 = sphi 0, %s74
    %s92 = sphi 0, %s92
    %s94 = sphi 0, %s92
    %s95 = sphi 0, %s94
    %s109 = sphi 0, %s95
    %s113 = sphi 0, %s113
    %s115 = sphi 0, %s113
    %s116 = sphi 0, %s115
    %s130 = sphi 0, %s116
    %s134 = sphi 0, %s134
    %s136 = sphi 0, %s134
    %s137 = sphi 0, %s136
    %s151 = sphi 0, %s137
    %s155 = sphi 0, %s155
    %s157 = sphi 0, %s155
    %s158 = sphi 0, %s157
    %s172 = sphi 0, %s158
    %s176 = sphi 0, %s176
    %s178 = sphi 0, %s176
    %s179 = sphi 0, %s178
    %s193 = sphi 0, %s179
    %s199 = sphi 0, %s201
    %s202 = sphi 0, %s199
    %s203 = sphi 0, %s202
    %s219 = sphi 0, %s203
  $region4: #{_forward.1} parent=0 // loop_header_branch
    %19 = sbr.rel (%p17) target = $region8
  $region5: #{_forward.1} parent=0 // loop_body
    %s21 = ssub.s32 %s16, 1
    %s22 = ssub.s32 %s16, 2
    %s23 = sadd.s32 %s16, 1
    %s24 = ssub.s32 %s16, %s23
    %p25 = scmp.eq.s32.totalorder %s24, 0
    %s27 = sadd.s32 %s26, 1
    %s28 = scalar_select %p25, %s26, %s27
    %p31 = pneg %p25
    %p32 = scmp.eq.s32.totalorder %s16, 1
    %p33 = por %p31, %p32
    %p34 = scmp.ne.s32.totalorder %s26, %s29
    %p35 = scmp.eq.s32.totalorder %s16, 0
    %p36 = por %p34, %p35
    %p37 = scmp.ne.s32.totalorder %s26, %s29
    %p38 = scmp.eq.s32.totalorder %s21, 1
    %p39 = por %p37, %p38
    %p40 = scmp.ne.s32.totalorder %s29, %s30
    %p41 = scmp.eq.s32.totalorder %s21, 0
    %p42 = por %p40, %p41
    %p43 = scmp.ne.s32.totalorder %s29, %s30
    %p44 = scmp.eq.s32.totalorder %s22, 1
    %p45 = por %p43, %p44
    %p47 = scmp.ne.s32.totalorder %s30, %s46
    %p48 = scmp.eq.s32.totalorder %s22, 0
    %p49 = por %p47, %p48
    %s51 = sadd.s32 %s50, 1
    %p54 = scmp.eq.s32.totalorder %s16, 1
    %p55 = scmp.ne.s32.totalorder %s50, %s52
    %p56 = scmp.eq.s32.totalorder %s16, 0
    %p57 = por %p55, %p56
    %p58 = scmp.ne.s32.totalorder %s50, %s52
    %p59 = scmp.eq.s32.totalorder %s21, 1
    %p60 = por %p58, %p59
    %p61 = scmp.ne.s32.totalorder %s52, %s53
    %p62 = scmp.eq.s32.totalorder %s21, 0
    %p63 = por %p61, %p62
    %p64 = scmp.ne.s32.totalorder %s52, %s53
    %p65 = scmp.eq.s32.totalorder %s22, 1
    %p66 = por %p64, %p65
    %p68 = scmp.ne.s32.totalorder %s53, %s67
    %p69 = scmp.eq.s32.totalorder %s22, 0
    %p70 = por %p68, %p69
    %s72 = sadd.s32 %s71, 1
    %p75 = scmp.eq.s32.totalorder %s16, 1
    %p76 = scmp.ne.s32.totalorder %s71, %s73
    %p77 = scmp.eq.s32.totalorder %s16, 0
    %p78 = por %p76, %p77
    %p79 = scmp.ne.s32.totalorder %s71, %s73
    %p80 = scmp.eq.s32.totalorder %s21, 1
    %p81 = por %p79, %p80
    %p82 = scmp.ne.s32.totalorder %s73, %s74
    %p83 = scmp.eq.s32.totalorder %s21, 0
    %p84 = por %p82, %p83
    %p85 = scmp.ne.s32.totalorder %s73, %s74
    %p86 = scmp.eq.s32.totalorder %s22, 1
    %p87 = por %p85, %p86
    %p89 = scmp.ne.s32.totalorder %s74, %s88
    %p90 = scmp.eq.s32.totalorder %s22, 0
    %p91 = por %p89, %p90
    %s93 = sadd.s32 %s92, 1
    %p96 = scmp.eq.s32.totalorder %s16, 1
    %p97 = scmp.ne.s32.totalorder %s92, %s94
    %p98 = scmp.eq.s32.totalorder %s16, 0
    %p99 = por %p97, %p98
    %p100 = scmp.ne.s32.totalorder %s92, %s94
    %p101 = scmp.eq.s32.totalorder %s21, 1
    %p102 = por %p100, %p101
    %p103 = scmp.ne.s32.totalorder %s94, %s95
    %p104 = scmp.eq.s32.totalorder %s21, 0
    %p105 = por %p103, %p104
    %p106 = scmp.ne.s32.totalorder %s94, %s95
    %p107 = scmp.eq.s32.totalorder %s22, 1
    %p108 = por %p106, %p107
    %p110 = scmp.ne.s32.totalorder %s95, %s109
    %p111 = scmp.eq.s32.totalorder %s22, 0
    %p112 = por %p110, %p111
    %s114 = sadd.s32 %s113, 1
    %p117 = scmp.eq.s32.totalorder %s16, 1
    %p118 = scmp.ne.s32.totalorder %s113, %s115
    %p119 = scmp.eq.s32.totalorder %s16, 0
    %p120 = por %p118, %p119
    %p121 = scmp.ne.s32.totalorder %s113, %s115
    %p122 = scmp.eq.s32.totalorder %s21, 1
    %p123 = por %p121, %p122
    %p124 = scmp.ne.s32.totalorder %s115, %s116
    %p125 = scmp.eq.s32.totalorder %s21, 0
    %p126 = por %p124, %p125
    %p127 = scmp.ne.s32.totalorder %s115, %s116
    %p128 = scmp.eq.s32.totalorder %s22, 1
    %p129 = por %p127, %p128
    %p131 = scmp.ne.s32.totalorder %s116, %s130
    %p132 = scmp.eq.s32.totalorder %s22, 0
    %p133 = por %p131, %p132
    %s135 = sadd.s32 %s134, 1
    %p138 = scmp.eq.s32.totalorder %s16, 1
    %p139 = scmp.ne.s32.totalorder %s134, %s136
    %p140 = scmp.eq.s32.totalorder %s16, 0
    %p141 = por %p139, %p140
    %p142 = scmp.ne.s32.totalorder %s134, %s136
    %p143 = scmp.eq.s32.totalorder %s21, 1
    %p144 = por %p142, %p143
    %p145 = scmp.ne.s32.totalorder %s136, %s137
    %p146 = scmp.eq.s32.totalorder %s21, 0
    %p147 = por %p145, %p146
    %p148 = scmp.ne.s32.totalorder %s136, %s137
    %p149 = scmp.eq.s32.totalorder %s22, 1
    %p150 = por %p148, %p149
    %p152 = scmp.ne.s32.totalorder %s137, %s151
    %p153 = scmp.eq.s32.totalorder %s22, 0
    %p154 = por %p152, %p153
    %s156 = sadd.s32 %s155, 1
    %p159 = scmp.eq.s32.totalorder %s16, 1
    %p160 = scmp.ne.s32.totalorder %s155, %s157
    %p161 = scmp.eq.s32.totalorder %s16, 0
    %p162 = por %p160, %p161
    %p163 = scmp.ne.s32.totalorder %s155, %s157
    %p164 = scmp.eq.s32.totalorder %s21, 1
    %p165 = por %p163, %p164
    %p166 = scmp.ne.s32.totalorder %s157, %s158
    %p167 = scmp.eq.s32.totalorder %s21, 0
    %p168 = por %p166, %p167
    %p169 = scmp.ne.s32.totalorder %s157, %s158
    %p170 = scmp.eq.s32.totalorder %s22, 1
    %p171 = por %p169, %p170
    %p173 = scmp.ne.s32.totalorder %s158, %s172
    %p174 = scmp.eq.s32.totalorder %s22, 0
    %p175 = por %p173, %p174
    %s177 = sadd.s32 %s176, 1
    %p180 = scmp.eq.s32.totalorder %s16, 1
    %p181 = scmp.ne.s32.totalorder %s176, %s178
    %p182 = scmp.eq.s32.totalorder %s16, 0
    %p183 = por %p181, %p182
    %p184 = scmp.ne.s32.totalorder %s176, %s178
    %p185 = scmp.eq.s32.totalorder %s21, 1
    %p186 = por %p184, %p185
    %p187 = scmp.ne.s32.totalorder %s178, %s179
    %p188 = scmp.eq.s32.totalorder %s21, 0
    %p189 = por %p187, %p188
    %p190 = scmp.ne.s32.totalorder %s178, %s179
    %p191 = scmp.eq.s32.totalorder %s22, 1
    %p192 = por %p190, %p191
    %p194 = scmp.ne.s32.totalorder %s179, %s193
    %p195 = scmp.eq.s32.totalorder %s22, 0
    %p196 = por %p194, %p195
    %s197 = ssub.s32 %s16, %s23
    %p198 = scmp.eq.s32.totalorder %s197, 0
    %s200 = sadd.s32 %s199, 1
    %s201 = scalar_select %p198, %s199, %s200
    %p204 = pneg %p198
    %p205 = scmp.eq.s32.totalorder %s16, 1
    %p206 = por %p204, %p205
    %p207 = scmp.ne.s32.totalorder %s199, %s202
    %p208 = scmp.eq.s32.totalorder %s16, 0
    %p209 = por %p207, %p208
    %p210 = scmp.ne.s32.totalorder %s199, %s202
    %p211 = scmp.eq.s32.totalorder %s21, 1
    %p212 = por %p210, %p211
    %p213 = scmp.ne.s32.totalorder %s202, %s203
    %p214 = scmp.eq.s32.totalorder %s21, 0
    %p215 = por %p213, %p214
    %p216 = scmp.ne.s32.totalorder %s202, %s203
    %p217 = scmp.eq.s32.totalorder %s22, 1
    %p218 = por %p216, %p217
    %p220 = scmp.ne.s32.totalorder %s203, %s219
    %p221 = scmp.eq.s32.totalorder %s22, 0
    %p222 = por %p220, %p221
    %p223 = scmp.le.s32.totalorder 1, %s16
    %p224 = scmp.lt.s32.totalorder %s16, 3
    %p225 = pnand %p223, %p224
    %p226 = pneg %p225
    // Predicated region
    $region9: #{_forward.1} parent=5 // pred_check
      _
    $region10: #{_forward.1} parent=5 // pred_check_branch
      %228 = sbr.rel (%p225) target = $region12
    $region11: #{_forward.1} parent=5 // pred_region
      %s229 = ssub.s32 %s16, 1
      // Predicated region
      $region13: #{_forward.1} parent=11 // pred_check
        %p230 = pneg %p63
      $region14: #{_forward.1} parent=11 // pred_check_branch
        %232 = sbr.rel (%p230) target = $region16
      $region15: #{_forward.1} parent=11 // pred_region
        _
      $region16: #{_forward.1} parent=11 // pred_fallthru
        _
      // Predicated region
      $region17: #{_forward.1} parent=11 // pred_check
        %p233 = pneg %p84
      $region18: #{_forward.1} parent=11 // pred_check_branch
        %235 = sbr.rel (%p233) target = $region20
      $region19: #{_forward.1} parent=11 // pred_region
        _
      $region20: #{_forward.1} parent=11 // pred_fallthru
        _
      // Predicated region
      $region21: #{_forward.1} parent=11 // pred_check
        %p236 = pneg %p105
      $region22: #{_forward.1} parent=11 // pred_check_branch
        %238 = sbr.rel (%p236) target = $region24
      $region23: #{_forward.1} parent=11 // pred_region
        _
      $region24: #{_forward.1} parent=11 // pred_fallthru
        _
      // Predicated region
      $region25: #{_forward.1} parent=11 // pred_check
        %p239 = pneg %p126
      $region26: #{_forward.1} parent=11 // pred_check_branch
        %241 = sbr.rel (%p239) target = $region28
      $region27: #{_forward.1} parent=11 // pred_region
        _
      $region28: #{_forward.1} parent=11 // pred_fallthru
        _
      // Predicated region
      $region29: #{_forward.1} parent=11 // pred_check
        %p242 = pneg %p147
      $region30: #{_forward.1} parent=11 // pred_check_branch
        %244 = sbr.rel (%p242) target = $region32
      $region31: #{_forward.1} parent=11 // pred_region
        _
      $region32: #{_forward.1} parent=11 // pred_fallthru
        _
      // Predicated region
      $region33: #{_forward.1} parent=11 // pred_check
        %p245 = pneg %p168
      $region34: #{_forward.1} parent=11 // pred_check_branch
        %247 = sbr.rel (%p245) target = $region36
      $region35: #{_forward.1} parent=11 // pred_region
        _
      $region36: #{_forward.1} parent=11 // pred_fallthru
        _
      // Predicated region
      $region37: #{_forward.1} parent=11 // pred_check
        %p248 = pneg %p189
      $region38: #{_forward.1} parent=11 // pred_check_branch
        %250 = sbr.rel (%p248) target = $region40
      $region39: #{_forward.1} parent=11 // pred_region
        _
      $region40: #{_forward.1} parent=11 // pred_fallthru
        _
    $region12: #{_forward.1} parent=5 // pred_fallthru
      _
    %p251 = scmp.lt.s32.totalorder %s16, 2
    // Predicated region
    $region41: #{_forward.1} parent=5 // pred_check
      %p252 = pneg %p251
    $region42: #{_forward.1} parent=5 // pred_check_branch
      %254 = sbr.rel (%p252) target = $region44
    $region43: #{_forward.1} parent=5 // pred_region
      // Predicated region
      $region45: #{_forward.1} parent=43 // pred_check
        %p255 = pneg %p36
      $region46: #{_forward.1} parent=43 // pred_check_branch
        %257 = sbr.rel (%p255) target = $region48
      $region47: #{_forward.1} parent=43 // pred_region
        %p258 = scmp.lt.s32.totalorder %s16, 1
        %s259 = scalar_select %p258, %s16, 1
        %s260 = smul.addr %s259, 12
        %s261 = smul.addr %s260, 8
        %s262 = scalar_lea.vmem %s0, %s261
      $region48: #{_forward.1} parent=43 // pred_fallthru
        _
    $region44: #{_forward.1} parent=5 // pred_fallthru
      _
    %p263 = scmp.le.s32.totalorder 1, %s16
    %p264 = scmp.lt.s32.totalorder %s16, 3
    %p265 = pnand %p263, %p264
    %p266 = pneg %p265
    // Predicated region
    $region49: #{_forward.1} parent=5 // pred_check
      _
    $region50: #{_forward.1} parent=5 // pred_check_branch
      %268 = sbr.rel (%p265) target = $region52
    $region51: #{_forward.1} parent=5 // pred_region
      %s269 = ssub.s32 %s16, 1
      %p270 = scmp.lt.s32.totalorder %s21, 1
      %s271 = scalar_select %p270, %s21, 1
      %s272 = smul.addr %s271, 12
      %s273 = smul.addr %s272, 8
      %s274 = scalar_lea.vmem %s0, %s273
      %p275 = pneg %p42
      %p276 = pneg %p39
      %p277 = pneg %p63
      %p278 = pneg %p60
      %p279 = pneg %p84
      %p280 = pneg %p81
      %p281 = pneg %p105
      %p282 = pneg %p102
      %p283 = pneg %p126
      %p284 = pneg %p123
      %p285 = pneg %p147
      %p286 = pneg %p144
      %p287 = pneg %p168
      %p288 = pneg %p165
      %p289 = pneg %p189
      %p290 = pneg %p186
      %p291 = pneg %p215
      %p292 = pneg %p212
      %p293 = scmp.lt.s32.totalorder %s21, 1
      %s294 = scalar_select %p293, %s21, 1
      %s295 = smul.addr %s294, 3
      %s296 = scalar_lea.vmem %s8, %s295
      %p297 = scmp.lt.s32.totalorder %s21, 1
      %s298 = scalar_select %p297, %s21, 1
      %s299 = smul.addr %s298, 12
      %s300 = smul.addr %s299, 8
      %s301 = scalar_lea.vmem %s0, %s300
      %p302 = scmp.lt.s32.totalorder %s21, 1
      %s303 = scalar_select %p302, %s21, 1
      %s304 = smul.addr %s303, 3
      %s305 = scalar_lea.vmem %s8, %s304
      %v306 = vld [vmem:[%s1] sm:$0xff]
      %v307 = vld [vmem:[%s1 + $0x8] sm:$0xff]
      %v308 = vld [vmem:[%s301] sm:$0xff]
      %v309 = vld [vmem:[%s301 + $0x8] sm:$0xff]
      %v310 = vld [vmem:[%s301 + $0x10] sm:$0xff]
      %v311 = vld [vmem:[%s301 + $0x18] sm:$0xff]
      %v312 = vld [vmem:[%s301 + $0x20] sm:$0xff]
      %v313 = vld [vmem:[%s301 + $0x28] sm:$0xff]
      %v314 = vld [vmem:[%s301 + $0x30] sm:$0xff]
      %v315 = vld [vmem:[%s301 + $0x38] sm:$0xff]
      %v316 = vld [vmem:[%s301 + $0x40] sm:$0xff]
      %v317 = vld [vmem:[%s301 + $0x48] sm:$0x7]
      %v318 = vld [vmem:[%s301 + $0x50] sm:$0x7]
      %v319 = vld [vmem:[%s301 + $0x58] sm:$0x7]
      %v320 = vld [vmem:[%s2] sm:$0xff]
      %v321 = vld [vmem:[%s2 + $0x8] sm:$0xff]
      %323 = vset.pattern.permute.xlu0 0
      %324 = vperm.xlu0 %323, %v320
      %v325 = vpop.permute.xlu0 %324
      %328 = vset.pattern.permute.xlu0 0
      %329 = vperm.xlu0 %328, %v321
      %v330 = vpop.permute.xlu0 %329
      %vm332 = vcmask 220160
      %v334 = vsel %vm332, %v306, 0
      %v337 = vsel %vm332, %v307, 0
      %vm339 = vcmask 1042432
      %v341 = vsel %vm339, %v317, 0
      %v344 = vsel %vm339, %v318, 0
      %v347 = vsel %vm339, %v319, 0
      %349 = vmatpush.msra.mxu0 0.0
      %350 = vmatpush.msra.mxu0 0.0
      %351 = vmatpush.msra.mxu0 0.0
      %352 = vmatpush.msra.mxu0 0.0
      %353 = vmatpush.msra.mxu0 0.0
      %354 = vmatpush.msra.mxu0 0.0
      %355 = vmatpush.msra.mxu0 0.0
      %356 = vmatpush.msra.mxu0 0.0
      %357 = vmatpush.msra.mxu0 0.0
      %358 = vmatpush.msra.mxu0 0.0
      %359 = vmatpush.msra.mxu0 0.0
      %360 = vmatpush.msra.mxu0 0.0
      %361 = vmatpush.msra.mxu0 %v341
      %362 = vmatpush.msra.mxu0 %v314
      %363 = vmatpush.msra.mxu0 %v311
      %364 = vmatpush.msra.mxu0 %v308
      %365 = vmatmul.f32.gmra.mxu0 %v334
      %v366 = vpop.f32.mrf.mxu0
      %v367 = vadd.f32 %v325, %v366
      %368 = vmatmul.f32.gmra.mxu0 %v337
      %v369 = vpop.f32.mrf.mxu0
      %v370 = vadd.f32 %v330, %v369
      %371 = vdwg.mxu0
      %372 = vmatpush.msra.mxu0 0.0
      %373 = vmatpush.msra.mxu0 0.0
      %374 = vmatpush.msra.mxu0 0.0
      %375 = vmatpush.msra.mxu0 0.0
      %376 = vmatpush.msra.mxu0 0.0
      %377 = vmatpush.msra.mxu0 0.0
      %378 = vmatpush.msra.mxu0 0.0
      %379 = vmatpush.msra.mxu0 0.0
      %380 = vmatpush.msra.mxu0 0.0
      %381 = vmatpush.msra.mxu0 0.0
      %382 = vmatpush.msra.mxu0 0.0
      %383 = vmatpush.msra.mxu0 0.0
      %384 = vmatpush.msra.mxu0 %v344
      %385 = vmatpush.msra.mxu0 %v315
      %386 = vmatpush.msra.mxu0 %v312
      %387 = vmatpush.msra.mxu0 %v309
      %388 = vmatmul.f32.gmra.mxu0 %v334
      %v389 = vpop.f32.mrf.mxu0
      %v390 = vadd.f32 %v325, %v389
      %391 = vmatmul.f32.gmra.mxu0 %v337
      %v392 = vpop.f32.mrf.mxu0
      %v393 = vadd.f32 %v330, %v392
      %394 = vdwg.mxu0
      %395 = vmatpush.msra.mxu0 0.0
      %396 = vmatpush.msra.mxu0 0.0
      %397 = vmatpush.msra.mxu0 0.0
      %398 = vmatpush.msra.mxu0 0.0
      %399 = vmatpush.msra.mxu0 0.0
      %400 = vmatpush.msra.mxu0 0.0
      %401 = vmatpush.msra.mxu0 0.0
      %402 = vmatpush.msra.mxu0 0.0
      %403 = vmatpush.msra.mxu0 0.0
      %404 = vmatpush.msra.mxu0 0.0
      %405 = vmatpush.msra.mxu0 0.0
      %406 = vmatpush.msra.mxu0 0.0
      %407 = vmatpush.msra.mxu0 %v347
      %408 = vmatpush.msra.mxu0 %v316
      %409 = vmatpush.msra.mxu0 %v313
      %410 = vmatpush.msra.mxu0 %v310
      %411 = vmatmul.f32.gmra.mxu0 %v334
      %v412 = vpop.f32.mrf.mxu0
      %v413 = vadd.f32 %v325, %v412
      %414 = vmatmul.f32.gmra.mxu0 %v337
      %v415 = vpop.f32.mrf.mxu0
      %v416 = vadd.f32 %v330, %v415
      %417 = vdwg.mxu0
      %v418 = vmax.f32 %v367, 0.0
      %v419 = vmax.f32 %v390, 0.0
      %v420 = vmax.f32 %v413, 0.0
      %v421 = vmax.f32 %v370, 0.0
      %v422 = vmax.f32 %v393, 0.0
      %v423 = vmax.f32 %v416, 0.0
      %v424 = vld [vmem:[%s7] sm:$0x7]
      %v426 = vperm.slane %v424, 0
      %v427 = vperm.slane %v424, 1
      %v428 = vperm.slane %v424, 2
      %v432 = vmul.f32 %v418, %v426
      %v433 = vmul.f32 %v419, %v427
      %v434 = vmul.f32 %v420, %v428
      %v435 = vmul.f32 %v421, %v426
      %v436 = vmul.f32 %v422, %v427
      %v437 = vmul.f32 %v423, %v428
      %440 = vrot.lane.b32.xlu0 %v434, 19
      %v441 = vpop.permute.xlu0 %440
      %442 = vrot.lane.b32.xlu0 %v437, 19
      %v443 = vpop.permute.xlu0 %442
      %450 = vrot.lane.b32.xlu0 %v432, 19
      %v451 = vpop.permute.xlu0 %450
      %452 = vrot.lane.b32.xlu0 %v433, 19
      %v453 = vpop.permute.xlu0 %452
      %454 = vrot.lane.b32.xlu0 %v435, 19
      %v455 = vpop.permute.xlu0 %454
      %456 = vrot.lane.b32.xlu0 %v436, 19
      %v457 = vpop.permute.xlu0 %456
      %vm458 = vcmask 154624
      %v459 = vsel %vm458, %v451, %v453
      %v460 = vsel %vm458, %v453, %v441
      %v461 = vsel %vm458, %v455, %v457
      %v462 = vsel %vm458, %v457, %v443
      %v469 = vsel %vm458, %v441, %v451
      %v470 = vsel %vm458, %v443, %v455
      %471 = vrot.lane.b32.xlu0 %v434, 18
      %v472 = vpop.permute.xlu0 %471
      %473 = vrot.lane.b32.xlu0 %v437, 18
      %v474 = vpop.permute.xlu0 %473
      %477 = vrot.lane.b32.xlu0 %v432, 18
      %v478 = vpop.permute.xlu0 %477
      %479 = vrot.lane.b32.xlu0 %v433, 18
      %v480 = vpop.permute.xlu0 %479
      %481 = vrot.lane.b32.xlu0 %v435, 18
      %v482 = vpop.permute.xlu0 %481
      %483 = vrot.lane.b32.xlu0 %v436, 18
      %v484 = vpop.permute.xlu0 %483
      %vm485 = vcmask 146432
      %v486 = vsel %vm485, %v478, %v480
      %v487 = vsel %vm485, %v480, %v472
      %v488 = vsel %vm485, %v482, %v484
      %v489 = vsel %vm485, %v484, %v474
      %v496 = vsel %vm485, %v472, %v478
      %v497 = vsel %vm485, %v474, %v482
      %498 = vrot.lane.b32.xlu0 %v434, 17
      %v499 = vpop.permute.xlu0 %498
      %500 = vrot.lane.b32.xlu0 %v437, 17
      %v501 = vpop.permute.xlu0 %500
      %504 = vrot.lane.b32.xlu0 %v432, 17
      %v505 = vpop.permute.xlu0 %504
      %506 = vrot.lane.b32.xlu0 %v433, 17
      %v507 = vpop.permute.xlu0 %506
      %508 = vrot.lane.b32.xlu0 %v435, 17
      %v509 = vpop.permute.xlu0 %508
      %510 = vrot.lane.b32.xlu0 %v436, 17
      %v511 = vpop.permute.xlu0 %510
      %vm512 = vcmask 138240
      %v513 = vsel %vm512, %v505, %v507
      %v514 = vsel %vm512, %v507, %v499
      %v515 = vsel %vm512, %v509, %v511
      %v516 = vsel %vm512, %v511, %v501
      %v523 = vsel %vm512, %v499, %v505
      %v524 = vsel %vm512, %v501, %v509
      %525 = vrot.lane.b32.xlu0 %v434, 1
      %v526 = vpop.permute.xlu0 %525
      %527 = vrot.lane.b32.xlu0 %v437, 1
      %v528 = vpop.permute.xlu0 %527
      %531 = vrot.lane.b32.xlu0 %v432, 1
      %v532 = vpop.permute.xlu0 %531
      %533 = vrot.lane.b32.xlu0 %v433, 1
      %v534 = vpop.permute.xlu0 %533
      %535 = vrot.lane.b32.xlu0 %v435, 1
      %v536 = vpop.permute.xlu0 %535
      %537 = vrot.lane.b32.xlu0 %v436, 1
      %v538 = vpop.permute.xlu0 %537
      %vm539 = vcmask 7168
      %v540 = vsel %vm539, %v532, %v534
      %v541 = vsel %vm539, %v534, %v526
      %v542 = vsel %vm539, %v536, %v538
      %v543 = vsel %vm539, %v538, %v528
      %v550 = vsel %vm539, %v526, %v532
      %v551 = vsel %vm539, %v528, %v536
      %552 = vrot.lane.b32.xlu0 %v432, 127
      %v553 = vpop.permute.xlu0 %552
      %554 = vrot.lane.b32.xlu0 %v433, 127
      %v555 = vpop.permute.xlu0 %554
      %556 = vrot.lane.b32.xlu0 %v434, 127
      %v557 = vpop.permute.xlu0 %556
      %558 = vrot.lane.b32.xlu0 %v435, 127
      %v559 = vpop.permute.xlu0 %558
      %560 = vrot.lane.b32.xlu0 %v436, 127
      %v561 = vpop.permute.xlu0 %560
      %562 = vrot.lane.b32.xlu0 %v437, 127
      %v563 = vpop.permute.xlu0 %562
      %vm564 = vcmask 1039360
      %v565 = vsel %vm564, %v553, %v555
      %v566 = vsel %vm564, %v555, %v557
      %v567 = vsel %vm564, %v559, %v561
      %v568 = vsel %vm564, %v561, %v563
      %v577 = vsel %vm564, %v557, %v553
      %v578 = vsel %vm564, %v563, %v559
      %579 = vrot.lane.b32.xlu0 %v432, 111
      %v580 = vpop.permute.xlu0 %579
      %581 = vrot.lane.b32.xlu0 %v433, 111
      %v582 = vpop.permute.xlu0 %581
      %583 = vrot.lane.b32.xlu0 %v434, 111
      %v584 = vpop.permute.xlu0 %583
      %585 = vrot.lane.b32.xlu0 %v435, 111
      %v586 = vpop.permute.xlu0 %585
      %587 = vrot.lane.b32.xlu0 %v436, 111
      %v588 = vpop.permute.xlu0 %587
      %589 = vrot.lane.b32.xlu0 %v437, 111
      %v590 = vpop.permute.xlu0 %589
      %vm591 = vcmask 908288
      %v592 = vsel %vm591, %v580, %v582
      %v593 = vsel %vm591, %v582, %v584
      %v594 = vsel %vm591, %v586, %v588
      %v595 = vsel %vm591, %v588, %v590
      %v604 = vsel %vm591, %v584, %v580
      %v605 = vsel %vm591, %v590, %v586
      %606 = vrot.lane.b32.xlu0 %v432, 110
      %v607 = vpop.permute.xlu0 %606
      %608 = vrot.lane.b32.xlu0 %v433, 110
      %v609 = vpop.permute.xlu0 %608
      %610 = vrot.lane.b32.xlu0 %v434, 110
      %v611 = vpop.permute.xlu0 %610
      %612 = vrot.lane.b32.xlu0 %v435, 110
      %v613 = vpop.permute.xlu0 %612
      %614 = vrot.lane.b32.xlu0 %v436, 110
      %v615 = vpop.permute.xlu0 %614
      %616 = vrot.lane.b32.xlu0 %v437, 110
      %v617 = vpop.permute.xlu0 %616
      %vm618 = vcmask 900096
      %v619 = vsel %vm618, %v607, %v609
      %v620 = vsel %vm618, %v609, %v611
      %v621 = vsel %vm618, %v613, %v615
      %v622 = vsel %vm618, %v615, %v617
      %v631 = vsel %vm618, %v611, %v607
      %v632 = vsel %vm618, %v617, %v613
      %633 = vrot.lane.b32.xlu0 %v432, 109
      %v634 = vpop.permute.xlu0 %633
      %635 = vrot.lane.b32.xlu0 %v433, 109
      %v636 = vpop.permute.xlu0 %635
      %637 = vrot.lane.b32.xlu0 %v434, 109
      %v638 = vpop.permute.xlu0 %637
      %639 = vrot.lane.b32.xlu0 %v435, 109
      %v640 = vpop.permute.xlu0 %639
      %641 = vrot.lane.b32.xlu0 %v436, 109
      %v642 = vpop.permute.xlu0 %641
      %643 = vrot.lane.b32.xlu0 %v437, 109
      %v644 = vpop.permute.xlu0 %643
      %vm645 = vcmask 891904
      %v646 = vsel %vm645, %v634, %v636
      %v647 = vsel %vm645, %v636, %v638
      %v648 = vsel %vm645, %v640, %v642
      %v649 = vsel %vm645, %v642, %v644
      %v658 = vsel %vm645, %v638, %v634
      %v659 = vsel %vm645, %v644, %v640
      %v660 = vld [vmem:[%s3] sm:$0xff]
      %v661 = vld [vmem:[%s3 + $0x8] sm:$0xff]
      %v662 = vld [vmem:[%s3 + $0x10] sm:$0xff]
      %v663 = vld [vmem:[%s3 + $0x18] sm:$0xff]
      %v664 = vld [vmem:[%s3 + $0x20] sm:$0xff]
      %v665 = vld [vmem:[%s3 + $0x28] sm:$0xff]
      %v666 = vld [vmem:[%s3 + $0x30] sm:$0xff]
      %v667 = vld [vmem:[%s3 + $0x38] sm:$0xff]
      %v668 = vld [vmem:[%s4] sm:$0xff]
      %v669 = vld [vmem:[%s4 + $0x8] sm:$0xff]
      %v670 = vld [vmem:[%s4 + $0x10] sm:$0xff]
      %v671 = vld [vmem:[%s4 + $0x18] sm:$0xff]
      %673 = vset.pattern.permute.xlu0 0
      %674 = vperm.xlu0 %673, %v668
      %v675 = vpop.permute.xlu0 %674
      %678 = vset.pattern.permute.xlu0 0
      %679 = vperm.xlu0 %678, %v669
      %v680 = vpop.permute.xlu0 %679
      %683 = vset.pattern.permute.xlu0 0
      %684 = vperm.xlu0 %683, %v670
      %v685 = vpop.permute.xlu0 %684
      %688 = vset.pattern.permute.xlu0 0
      %689 = vperm.xlu0 %688, %v671
      %v690 = vpop.permute.xlu0 %689
      %vm692 = vcmask 130048
      %v694 = vsel %vm692, %v661, 0
      %v697 = vsel %vm692, %v663, 0
      %v700 = vsel %vm692, %v665, 0
      %v703 = vsel %vm692, %v667, 0
      %705 = vmatpush.msra.mxu0 %v621
      %706 = vmatpush.msra.mxu0 %v619
      %707 = vmatpush.msra.mxu0 %v594
      %708 = vmatpush.msra.mxu0 %v592
      %709 = vmatpush.msra.mxu0 %v567
      %710 = vmatpush.msra.mxu0 %v565
      %711 = vmatpush.msra.mxu0 %v435
      %712 = vmatpush.msra.mxu0 %v432
      %713 = vmatpush.msra.mxu0 %v551
      %714 = vmatpush.msra.mxu0 %v550
      %715 = vmatpush.msra.mxu0 %v524
      %716 = vmatpush.msra.mxu0 %v523
      %717 = vmatpush.msra.mxu0 %v497
      %718 = vmatpush.msra.mxu0 %v496
      %719 = vmatpush.msra.mxu0 %v470
      %720 = vmatpush.msra.mxu0 %v469
      %721 = vmatmul.f32.gmra.mxu0 %v660
      %v722 = vpop.f32.mrf.mxu0
      %v723 = vadd.f32 %v675, %v722
      %724 = vmatmul.f32.gmra.mxu0 %v662
      %v725 = vpop.f32.mrf.mxu0
      %v726 = vadd.f32 %v680, %v725
      %727 = vmatmul.f32.gmra.mxu0 %v664
      %v728 = vpop.f32.mrf.mxu0
      %v729 = vadd.f32 %v685, %v728
      %730 = vmatmul.f32.gmra.mxu0 %v666
      %v731 = vpop.f32.mrf.mxu0
      %v732 = vadd.f32 %v690, %v731
      %733 = vdwg.mxu0
      %734 = vmatpush.msra.mxu0 0.0
      %735 = vmatpush.msra.mxu0 0.0
      %736 = vmatpush.msra.mxu0 0.0
      %737 = vmatpush.msra.mxu0 0.0
      %738 = vmatpush.msra.mxu0 0.0
      %739 = vmatpush.msra.mxu0 0.0
      %740 = vmatpush.msra.mxu0 0.0
      %741 = vmatpush.msra.mxu0 0.0
      %742 = vmatpush.msra.mxu0 0.0
      %743 = vmatpush.msra.mxu0 0.0
      %744 = vmatpush.msra.mxu0 0.0
      %745 = vmatpush.msra.mxu0 0.0
      %746 = vmatpush.msra.mxu0 0.0
      %747 = vmatpush.msra.mxu0 0.0
      %748 = vmatpush.msra.mxu0 %v648
      %749 = vmatpush.msra.mxu0 %v646
      %750 = vmatmul.f32.gmra.mxu0 %v694
      %v751 = vpop.f32.mrf.mxu0
      %v752 = vadd.f32 %v723, %v751
      %753 = vmatmul.f32.gmra.mxu0 %v697
      %v754 = vpop.f32.mrf.mxu0
      %v755 = vadd.f32 %v726, %v754
      %756 = vmatmul.f32.gmra.mxu0 %v700
      %v757 = vpop.f32.mrf.mxu0
      %v758 = vadd.f32 %v729, %v757
      %759 = vmatmul.f32.gmra.mxu0 %v703
      %v760 = vpop.f32.mrf.mxu0
      %v761 = vadd.f32 %v732, %v760
      %762 = vdwg.mxu0
      %763 = vmatpush.msra.mxu0 %v622
      %764 = vmatpush.msra.mxu0 %v620
      %765 = vmatpush.msra.mxu0 %v595
      %766 = vmatpush.msra.mxu0 %v593
      %767 = vmatpush.msra.mxu0 %v568
      %768 = vmatpush.msra.mxu0 %v566
      %769 = vmatpush.msra.mxu0 %v436
      %770 = vmatpush.msra.mxu0 %v433
      %771 = vmatpush.msra.mxu0 %v542
      %772 = vmatpush.msra.mxu0 %v540
      %773 = vmatpush.msra.mxu0 %v515
      %774 = vmatpush.msra.mxu0 %v513
      %775 = vmatpush.msra.mxu0 %v488
      %776 = vmatpush.msra.mxu0 %v486
      %777 = vmatpush.msra.mxu0 %v461
      %778 = vmatpush.msra.mxu0 %v459
      %779 = vmatmul.f32.gmra.mxu0 %v660
      %v780 = vpop.f32.mrf.mxu0
      %v781 = vadd.f32 %v675, %v780
      %782 = vmatmul.f32.gmra.mxu0 %v662
      %v783 = vpop.f32.mrf.mxu0
      %v784 = vadd.f32 %v680, %v783
      %785 = vmatmul.f32.gmra.mxu0 %v664
      %v786 = vpop.f32.mrf.mxu0
      %v787 = vadd.f32 %v685, %v786
      %788 = vmatmul.f32.gmra.mxu0 %v666
      %v789 = vpop.f32.mrf.mxu0
      %v790 = vadd.f32 %v690, %v789
      %791 = vdwg.mxu0
      %792 = vmatpush.msra.mxu0 0.0
      %793 = vmatpush.msra.mxu0 0.0
      %794 = vmatpush.msra.mxu0 0.0
      %795 = vmatpush.msra.mxu0 0.0
      %796 = vmatpush.msra.mxu0 0.0
      %797 = vmatpush.msra.mxu0 0.0
      %798 = vmatpush.msra.mxu0 0.0
      %799 = vmatpush.msra.mxu0 0.0
      %800 = vmatpush.msra.mxu0 0.0
      %801 = vmatpush.msra.mxu0 0.0
      %802 = vmatpush.msra.mxu0 0.0
      %803 = vmatpush.msra.mxu0 0.0
      %804 = vmatpush.msra.mxu0 0.0
      %805 = vmatpush.msra.mxu0 0.0
      %806 = vmatpush.msra.mxu0 %v649
      %807 = vmatpush.msra.mxu0 %v647
      %808 = vmatmul.f32.gmra.mxu0 %v694
      %v809 = vpop.f32.mrf.mxu0
      %v810 = vadd.f32 %v781, %v809
      %811 = vmatmul.f32.gmra.mxu0 %v697
      %v812 = vpop.f32.mrf.mxu0
      %v813 = vadd.f32 %v784, %v812
      %814 = vmatmul.f32.gmra.mxu0 %v700
      %v815 = vpop.f32.mrf.mxu0
      %v816 = vadd.f32 %v787, %v815
      %817 = vmatmul.f32.gmra.mxu0 %v703
      %v818 = vpop.f32.mrf.mxu0
      %v819 = vadd.f32 %v790, %v818
      %820 = vdwg.mxu0
      %821 = vmatpush.msra.mxu0 %v632
      %822 = vmatpush.msra.mxu0 %v631
      %823 = vmatpush.msra.mxu0 %v605
      %824 = vmatpush.msra.mxu0 %v604
      %825 = vmatpush.msra.mxu0 %v578
      %826 = vmatpush.msra.mxu0 %v577
      %827 = vmatpush.msra.mxu0 %v437
      %828 = vmatpush.msra.mxu0 %v434
      %829 = vmatpush.msra.mxu0 %v543
      %830 = vmatpush.msra.mxu0 %v541
      %831 = vmatpush.msra.mxu0 %v516
      %832 = vmatpush.msra.mxu0 %v514
      %833 = vmatpush.msra.mxu0 %v489
      %834 = vmatpush.msra.mxu0 %v487
      %835 = vmatpush.msra.mxu0 %v462
      %836 = vmatpush.msra.mxu0 %v460
      %837 = vmatmul.f32.gmra.mxu0 %v660
      %v838 = vpop.f32.mrf.mxu0
      %v839 = vadd.f32 %v675, %v838
      %840 = vmatmul.f32.gmra.mxu0 %v662
      %v841 = vpop.f32.mrf.mxu0
      %v842 = vadd.f32 %v680, %v841
      %843 = vmatmul.f32.gmra.mxu0 %v664
      %v844 = vpop.f32.mrf.mxu0
      %v845 = vadd.f32 %v685, %v844
      %846 = vmatmul.f32.gmra.mxu0 %v666
      %v847 = vpop.f32.mrf.mxu0
      %v848 = vadd.f32 %v690, %v847
      %849 = vdwg.mxu0
      %850 = vmatpush.msra.mxu0 0.0
      %851 = vmatpush.msra.mxu0 0.0
      %852 = vmatpush.msra.mxu0 0.0
      %853 = vmatpush.msra.mxu0 0.0
      %854 = vmatpush.msra.mxu0 0.0
      %855 = vmatpush.msra.mxu0 0.0
      %856 = vmatpush.msra.mxu0 0.0
      %857 = vmatpush.msra.mxu0 0.0
      %858 = vmatpush.msra.mxu0 0.0
      %859 = vmatpush.msra.mxu0 0.0
      %860 = vmatpush.msra.mxu0 0.0
      %861 = vmatpush.msra.mxu0 0.0
      %862 = vmatpush.msra.mxu0 0.0
      %863 = vmatpush.msra.mxu0 0.0
      %864 = vmatpush.msra.mxu0 %v659
      %865 = vmatpush.msra.mxu0 %v658
      %866 = vmatmul.f32.gmra.mxu0 %v694
      %v867 = vpop.f32.mrf.mxu0
      %v868 = vadd.f32 %v839, %v867
      %869 = vmatmul.f32.gmra.mxu0 %v697
      %v870 = vpop.f32.mrf.mxu0
      %v871 = vadd.f32 %v842, %v870
      %872 = vmatmul.f32.gmra.mxu0 %v700
      %v873 = vpop.f32.mrf.mxu0
      %v874 = vadd.f32 %v845, %v873
      %875 = vmatmul.f32.gmra.mxu0 %v703
      %v876 = vpop.f32.mrf.mxu0
      %v877 = vadd.f32 %v848, %v876
      %878 = vdwg.mxu0
      %v879 = vmax.f32 %v752, 0.0
      %v880 = vmax.f32 %v810, 0.0
      %v881 = vmax.f32 %v868, 0.0
      %v882 = vmax.f32 %v755, 0.0
      %v883 = vmax.f32 %v813, 0.0
      %v884 = vmax.f32 %v871, 0.0
      %v885 = vmax.f32 %v758, 0.0
      %v886 = vmax.f32 %v816, 0.0
      %v887 = vmax.f32 %v874, 0.0
      %v888 = vmax.f32 %v761, 0.0
      %v889 = vmax.f32 %v819, 0.0
      %v890 = vmax.f32 %v877, 0.0
      %v891 = vld [vmem:[%s5] sm:$0xff]
      %v892 = vld [vmem:[%s5 + $0x8] sm:$0xff]
      %v893 = vld [vmem:[%s5 + $0x10] sm:$0xff]
      %v894 = vld [vmem:[%s5 + $0x18] sm:$0xff]
      %896 = vset.pattern.permute.xlu0 0
      %897 = vperm.xlu0 %896, %v891
      %v898 = vpop.permute.xlu0 %897
      %901 = vset.pattern.permute.xlu0 0
      %902 = vperm.xlu0 %901, %v892
      %v903 = vpop.permute.xlu0 %902
      %906 = vset.pattern.permute.xlu0 0
      %907 = vperm.xlu0 %906, %v893
      %v908 = vpop.permute.xlu0 %907
      %911 = vset.pattern.permute.xlu0 0
      %912 = vperm.xlu0 %911, %v894
      %v913 = vpop.permute.xlu0 %912
      %v915 = vmul.f32 %v879, %v898
      %v916 = vmul.f32 %v880, %v898
      %v917 = vmul.f32 %v881, %v898
      %v918 = vmul.f32 %v882, %v903
      %v919 = vmul.f32 %v883, %v903
      %v920 = vmul.f32 %v884, %v903
      %v921 = vmul.f32 %v885, %v908
      %v922 = vmul.f32 %v886, %v908
      %v923 = vmul.f32 %v887, %v908
      %v924 = vmul.f32 %v888, %v913
      %v925 = vmul.f32 %v889, %v913
      %v926 = vmul.f32 %v890, %v913
      %v927 = vadd.f32 %v915, %v918
      %v928 = vadd.f32 %v927, %v921
      %v929 = vadd.f32 %v928, %v924
      %v930 = vrot.slane %v929, 4
      %v931 = vadd.f32 %v929, %v930
      %v932 = vrot.slane %v931, 2
      %v933 = vadd.f32 %v931, %v932
      %v934 = vrot.slane %v933, 1
      %v935 = vadd.f32 %v933, %v934
      %v936 = vadd.f32 %v916, %v919
      %v937 = vadd.f32 %v936, %v922
      %v938 = vadd.f32 %v937, %v925
      %v939 = vrot.slane %v938, 4
      %v940 = vadd.f32 %v938, %v939
      %v941 = vrot.slane %v940, 2
      %v942 = vadd.f32 %v940, %v941
      %v943 = vrot.slane %v942, 1
      %v944 = vadd.f32 %v942, %v943
      %v945 = vadd.f32 %v917, %v920
      %v946 = vadd.f32 %v945, %v923
      %v947 = vadd.f32 %v946, %v926
      %v948 = vrot.slane %v947, 4
      %v949 = vadd.f32 %v947, %v948
      %v950 = vrot.slane %v949, 2
      %v951 = vadd.f32 %v949, %v950
      %v952 = vrot.slane %v951, 1
      %v953 = vadd.f32 %v951, %v952
      %v954 = vld [vmem:[#allocation2] sm:$0x1]
      %956 = vset.pattern.permute.xlu0 0
      %957 = vperm.xlu0 %956, %v954
      %v958 = vpop.permute.xlu0 %957
      %v960 = vperm.slane %v958, 0
      %v961 = vadd.f32 %v935, %v960
      %v962 = vadd.f32 %v944, %v960
      %v963 = vadd.f32 %v953, %v960
      %v967 = vrot.slane %v962, 7
      %v968 = vrot.slane %v963, 6
      %vm969 = vcmask 1040384
      %v970 = vsel %vm969, %v961, %v967
      %vm971 = vcmask 1041408
      %v972 = vsel %vm971, %v970, %v968
      %v974 = vlaneseq
      %vm975 = vcmp.ge.s32.totalorder %v974, 0
      %vm976 = vcmp.lt.s32.totalorder %v974, 384
      %vm977 = vmand %vm975, %vm976
      %978 = vst.msk [vmem:[%s305] sm:$0x7] %vm977, %v972
      %p979 = scmp.lt.s32.totalorder %s21, 1
      %s980 = scalar_select %p979, %s21, 1
      %s981 = smul.addr %s980, 3
      %s982 = scalar_lea.vmem %s8, %s981
      // Predicated region
      $region53: #{_forward.1} parent=51 // pred_check
        %p983 = pneg %p212
      $region54: #{_forward.1} parent=51 // pred_check_branch
        %985 = sbr.rel (%p983) target = $region56
      $region55: #{_forward.1} parent=51 // pred_region
        _
      $region56: #{_forward.1} parent=51 // pred_fallthru
        _
    $region52: #{_forward.1} parent=5 // pred_fallthru
      _
    %p986 = scmp.le.s32.totalorder 2, %s16
    // Predicated region
    $region57: #{_forward.1} parent=5 // pred_check
      %p987 = pneg %p986
    $region58: #{_forward.1} parent=5 // pred_check_branch
      %989 = sbr.rel (%p987) target = $region60
    $region59: #{_forward.1} parent=5 // pred_region
      %s990 = ssub.s32 %s16, 2
      // Predicated region
      $region61: #{_forward.1} parent=59 // pred_check
        %p991 = pneg %p218
      $region62: #{_forward.1} parent=59 // pred_check_branch
        %993 = sbr.rel (%p991) target = $region64
      $region63: #{_forward.1} parent=59 // pred_region
        %p994 = scmp.lt.s32.totalorder %s22, 1
        %s995 = scalar_select %p994, %s22, 1
        %s996 = smul.addr %s995, 3
        %s997 = scalar_lea.vmem %s8, %s996
      $region64: #{_forward.1} parent=59 // pred_fallthru
        _
    $region60: #{_forward.1} parent=5 // pred_fallthru
      _
  $region6: #{_forward.1} parent=0 // loop_footer
    %s20 = sadd.s32 1, %s16
  $region7: #{_forward.1} parent=0 // loop_footer_branch
    %15 = sbr.rel target = $region3
  $region8: #{_forward.1} parent=0 // loop_exit
    _

</llo_original>
